<compile_context>
chip_gen: v7x
topology: tpu7x:2x2x1
jax: 0.10.0
libtpu: 0.0.40
codegen_flags: <defaults>
</compile_context>

<pallas_src>
import jax
import jax.numpy as jnp
from jax.experimental import pallas as pl
from jax.experimental.pallas import tpu as pltpu

_F32 = jnp.float32


def _multitask_loss_kernel(loss_a_ref, loss_b_ref, log_var_a_ref,
                           log_var_b_ref, out_ref):
    """All inputs are (1,)-shaped f32 SMEM scalars; output is a (1, 1) VMEM tile."""
    la = loss_a_ref[0]
    lb = loss_b_ref[0]
    va = log_var_a_ref[0]
    vb = log_var_b_ref[0]

    # Splat each SMEM scalar onto a (1, 1) vreg so that:
    #   * exp(-log_var) is executed on the EUP (the scalar core has no exp),
    #   * the mul/add run on the VPU with every operand at lane 0 (no XLU
    #     cross-lane align needed).
    la_v = jnp.full((1, 1), la, _F32)
    lb_v = jnp.full((1, 1), lb, _F32)
    va_v = jnp.full((1, 1), va, _F32)
    vb_v = jnp.full((1, 1), vb, _F32)

    out_ref[...] = (jnp.exp(-va_v) * la_v + va_v
                    + jnp.exp(-vb_v) * lb_v + vb_v)


def _multitask_loss_fwd_pallas(loss_a, loss_b, log_var_a, log_var_b):
    """Pallas forward pass. All args are (1,)-shaped f32 arrays."""
    out = pl.pallas_call(
        _multitask_loss_kernel,
        out_shape=jax.ShapeDtypeStruct((1, 1), _F32),
        in_specs=[pl.BlockSpec(memory_space=pltpu.SMEM)] * 4,
        out_specs=pl.BlockSpec(memory_space=pltpu.VMEM),
        cost_estimate=pl.CostEstimate(
            flops=8, transcendentals=2, bytes_accessed=20),
    )(loss_a, loss_b, log_var_a, log_var_b)
    return out.reshape((1,))


# ----- custom VJP so the learnable log-variances can actually be trained -----

@jax.custom_vjp
def _multitask_loss_core(loss_a, loss_b, log_var_a, log_var_b):
    return _multitask_loss_fwd_pallas(loss_a, loss_b, log_var_a, log_var_b)


def _core_fwd(loss_a, loss_b, log_var_a, log_var_b):
    out = _multitask_loss_fwd_pallas(loss_a, loss_b, log_var_a, log_var_b)
    return out, (loss_a, loss_b, log_var_a, log_var_b)


def _core_bwd(residuals, g):
    loss_a, loss_b, log_var_a, log_var_b = residuals
    precision_a = jnp.exp(-log_var_a)
    precision_b = jnp.exp(-log_var_b)
    d_loss_a = g * precision_a
    d_loss_b = g * precision_b
    d_log_var_a = g * (1.0 - precision_a * loss_a)
    d_log_var_b = g * (1.0 - precision_b * loss_b)
    return d_loss_a, d_loss_b, d_log_var_a, d_log_var_b


_multitask_loss_core.defvjp(_core_fwd, _core_bwd)


def multitask_loss(loss_a, loss_b, log_var_a, log_var_b):
    """JAX wrapper reproducing MultiTaskLoss.forward.

    Args:
      loss_a, loss_b: scalar (0-d or shape-(1,)) float task losses.
      log_var_a, log_var_b: shape-(1,) learnable log-variance parameters.
    Returns:
      shape-(1,) float32 combined loss (same as the PyTorch module output).
    """
    def canon(x):
        return jnp.asarray(x, _F32).reshape((1,))

    return _multitask_loss_core(canon(loss_a), canon(loss_b),
                                canon(log_var_a), canon(log_var_b))


if __name__ == "__main__":
    key = jax.random.PRNGKey(0)
    k_a, k_b = jax.random.split(key)

    # Deterministic parameter init, mirroring nn.Parameter(torch.zeros(1)).
    log_var_a = jnp.zeros((1,), dtype=jnp.float32)
    log_var_b = jnp.zeros((1,), dtype=jnp.float32)

    # Synthetic scalar task losses (what two task heads would produce).
    loss_a = jnp.abs(jax.random.normal(k_a, (), dtype=jnp.float32))
    loss_b = jnp.abs(jax.random.normal(k_b, (), dtype=jnp.float32))

    out = multitask_loss(loss_a, loss_b, log_var_a, log_var_b)
    out = jax.block_until_ready(out)

    # Forward reference check in plain JAX.
    ref = (jnp.exp(-log_var_a) * loss_a + log_var_a
           + jnp.exp(-log_var_b) * loss_b + log_var_b)
    assert out.shape == (1,)
    assert jnp.allclose(out, ref, atol=1e-6, rtol=1e-6), (out, ref)

    # Gradient check (the log-variances are trainable parameters).
    def scalar_loss(lva, lvb):
        return multitask_loss(loss_a, loss_b, lva, lvb)[0]

    g_a, g_b = jax.grad(scalar_loss, argnums=(0, 1))(log_var_a, log_var_b)
    ref_g_a = 1.0 - jnp.exp(-log_var_a) * loss_a
    ref_g_b = 1.0 - jnp.exp(-log_var_b) * loss_b
    assert jnp.allclose(g_a, ref_g_a, atol=1e-6, rtol=1e-6), (g_a, ref_g_a)
    assert jnp.allclose(g_b, ref_g_b, atol=1e-6, rtol=1e-6), (g_b, ref_g_b)

    print("KERNEL_OK")
</pallas_src>

<mosaic_0001>
module attributes {stable_mosaic.version = 11 : i64} {
  func.func @_multitask_loss_kernel(%arg0: memref<1xf32, #tpu.memory_space<smem>>, %arg1: memref<1xf32, #tpu.memory_space<smem>>, %arg2: memref<1xf32, #tpu.memory_space<smem>>, %arg3: memref<1xf32, #tpu.memory_space<smem>>, %arg4: memref<1x1xf32, #tpu.memory_space<vmem>>) attributes {dimension_semantics = [], scalar_prefetch = 0 : i64, scratch_operands = 0 : i64, tpu.core_type = #tpu.core_type<tc>} {
    %c0 = arith.constant 0 : index
    %0 = memref.load %arg0[%c0] : memref<1xf32, #tpu.memory_space<smem>>
    %c0_0 = arith.constant 0 : index
    %1 = memref.load %arg1[%c0_0] : memref<1xf32, #tpu.memory_space<smem>>
    %c0_1 = arith.constant 0 : index
    %2 = memref.load %arg2[%c0_1] : memref<1xf32, #tpu.memory_space<smem>>
    %c0_2 = arith.constant 0 : index
    %3 = memref.load %arg3[%c0_2] : memref<1xf32, #tpu.memory_space<smem>>
    %4 = vector.broadcast %0 : f32 to vector<1x1xf32>
    %5 = vector.broadcast %1 : f32 to vector<1x1xf32>
    %6 = vector.broadcast %2 : f32 to vector<1x1xf32>
    %7 = vector.broadcast %3 : f32 to vector<1x1xf32>
    %cst = arith.constant 0.000000e+00 : f32
    %8 = vector.broadcast %cst : f32 to vector<1x1xf32>
    %9 = arith.subf %8, %6 : vector<1x1xf32>
    %10 = math.exp %9 : vector<1x1xf32>
    %11 = arith.mulf %10, %4 : vector<1x1xf32>
    %12 = arith.addf %11, %6 : vector<1x1xf32>
    %cst_3 = arith.constant 0.000000e+00 : f32
    %13 = vector.broadcast %cst_3 : f32 to vector<1x1xf32>
    %14 = arith.subf %13, %7 : vector<1x1xf32>
    %15 = math.exp %14 : vector<1x1xf32>
    %16 = arith.mulf %15, %5 : vector<1x1xf32>
    %17 = arith.addf %12, %16 : vector<1x1xf32>
    %18 = arith.addf %17, %7 : vector<1x1xf32>
    %c0_4 = arith.constant 0 : index
    %c0_5 = arith.constant 0 : index
    %19 = vector.load %arg4[%c0_4, %c0_5] : memref<1x1xf32, #tpu.memory_space<vmem>>, vector<1x1xf32>
    tpu.vector_store %arg4[%c0_4, %c0_5], %18 {strides = array<i32>} : memref<1x1xf32, #tpu.memory_space<vmem>>, vector<1x1xf32>,
    return
  }
}

</mosaic_0001>

<llo_original>
// kernel: tpu_custom_call.1
$region0: #{tpu_custom_call.1}
  #allocation0 [shape = 'u32[]', space=smem, size = 0x4, offset = 0x4, fixed_abs, tag = 'smem constant byte address 0x4 - core index']
  #allocation1 [shape = 'u32[144,128]{1,0:T(1,128)}', space=vmem, size = 0x12000, scoped, tag = 'internal scratch']
  #allocation2 [shape = 'f32[1]{0:T(128)S(6)}', space=smem, size = 0x200, scoped, tag = 'scoped memory for tpu_custom_call.1']
  #allocation3 [shape = 'f32[1]{0:T(128)S(6)}', space=smem, size = 0x200, scoped, tag = 'scoped memory for tpu_custom_call.1']
  #allocation4 [shape = 'f32[1]{0:T(128)S(6)}', space=smem, size = 0x200, scoped, tag = 'scoped memory for tpu_custom_call.1']
  #allocation5 [shape = 'f32[1]{0:T(128)S(6)}', space=smem, size = 0x200, scoped, tag = 'scoped memory for tpu_custom_call.1']
  %s0 = inlined_call_operand.<no memory space> [shape: f32[1], index: 0, kind: input, shape index: {}]
  %s1 = inlined_call_operand.<no memory space> [shape: f32[1], index: 1, kind: input, shape index: {}]
  %s2 = inlined_call_operand.<no memory space> [shape: f32[1], index: 2, kind: input, shape index: {}]
  %s3 = inlined_call_operand.<no memory space> [shape: f32[1], index: 3, kind: input, shape index: {}]
  %s4 = inlined_call_operand.hbm [shape: f32[1,1], index: 4, kind: output, shape index: {}]
  %s5 = sld [smem:[#allocation0]]
  $region26: #{tpu_custom_call.1} parent=0
    _
  %s7 = ssub.s32 1, %s5
  %s8 = scalar_select 0, %s7, %s5
  %9 = sst [smem:[#allocation2]] %s0
  %10 = sst [smem:[#allocation3]] %s1
  %11 = sst [smem:[#allocation4]] %s2
  %12 = sst [smem:[#allocation5]] %s3
  $region1: #{tpu_custom_call.1} parent=0
    #allocation6 [shape = 'u8[512]{0}', space=vmem, size = 0x400, scoped, tag = 'output window, operand 0, single buffered']
    #allocation7 [shape = 's32[1]{0}', space=sflag, size = 0x4, scoped, tag = 'scoped memory for tpu_custom_call.1']
    %13 = vsyncpa [#allocation7], 0
    // Predicated region
    $region2: #{tpu_custom_call.1} parent=1 // pred_check
      _
    $region3: #{tpu_custom_call.1} parent=1 // pred_check_branch
      %15 = sbr.rel (0) target = $region5
    $region4: #{tpu_custom_call.1} parent=1 // pred_region
      _
    $region5: #{tpu_custom_call.1} parent=1 // pred_fallthru
      _
    // Predicated region
    $region6: #{tpu_custom_call.1} parent=1 // pred_check
      _
    $region7: #{tpu_custom_call.1} parent=1 // pred_check_branch
      %17 = sbr.rel (0) target = $region9
    $region8: #{tpu_custom_call.1} parent=1 // pred_region
      _
    $region9: #{tpu_custom_call.1} parent=1 // pred_fallthru
      _
    // Predicated region
    $region10: #{tpu_custom_call.1} parent=1 // pred_check
      _
    $region11: #{tpu_custom_call.1} parent=1 // pred_check_branch
      %19 = sbr.rel (0) target = $region13
    $region12: #{tpu_custom_call.1} parent=1 // pred_region
      _
    $region13: #{tpu_custom_call.1} parent=1 // pred_fallthru
      _
    // Predicated region
    $region14: #{tpu_custom_call.1} parent=1 // pred_check
      _
    $region15: #{tpu_custom_call.1} parent=1 // pred_check_branch
      %21 = sbr.rel (0) target = $region17
    $region16: #{tpu_custom_call.1} parent=1 // pred_region
      _
    $region17: #{tpu_custom_call.1} parent=1 // pred_fallthru
      _
    %s22 = sld [smem:[#allocation2]]
    %s23 = sld [smem:[#allocation3]]
    %s24 = sld [smem:[#allocation4]]
    %s25 = sld [smem:[#allocation5]]
    %v26 = vstv %s22
    %v27 = vstv %s23
    %v28 = vstv %s24
    %v29 = vstv %s25
    %v30 = vsub.f32 0.0, %v28
    %v31 = vmul.f32 %v30, 1.442695
    %v32 = vpow.pop %v31
    %v33 = vmul.f32 %v32, %v26
    %v34 = vadd.f32 %v33, %v28
    %v35 = vsub.f32 0.0, %v29
    %v36 = vmul.f32 %v35, 1.442695
    %v37 = vpow.pop %v36
    %v38 = vmul.f32 %v37, %v27
    %v39 = vadd.f32 %v34, %v38
    %v40 = vadd.f32 %v39, %v29
    %vm41 = vcmask 0
    %42 = vst.msk [vmem:[#allocation6] sm:$0x1] %vm41, %v40
    // Predicated region
    $region18: #{tpu_custom_call.1} parent=1 // pred_check
      _
    $region19: #{tpu_custom_call.1} parent=1 // pred_check_branch
      %44 = sbr.rel (0) target = $region21
    $region20: #{tpu_custom_call.1} parent=1 // pred_region
      %s46 = ssub.s32 16, 16
      %47 = vsyncadd [#allocation7], %s46
      %s49 = sshll.u32 [#allocation6], 4
      %s50 = int_to_ptr.vmem [resolvable:$true] %s49
      %52 = dma.vmem_to_hbm [thread:$0]  %s50, 16, %s4, [#allocation7]
    $region21: #{tpu_custom_call.1} parent=1 // pred_fallthru
      _
    // Predicated region
    $region22: #{tpu_custom_call.1} parent=1 // pred_check
      _
    $region23: #{tpu_custom_call.1} parent=1 // pred_check_branch
      %54 = sbr.rel (0) target = $region25
    $region24: #{tpu_custom_call.1} parent=1 // pred_region
      %55 = dma.done [#allocation7], 16
    $region25: #{tpu_custom_call.1} parent=1 // pred_fallthru
      _
    %56 = vsyncpa [#allocation7], 1

</llo_original>
